<compile_context>
chip_gen: v5e
topology: v5e:2x2
jax: 0.10.0
libtpu: 0.0.40
codegen_flags: <defaults>
</compile_context>

<pallas_src>
import functools

import jax
import jax.numpy as jnp
from jax.experimental import pallas as pl
from jax.experimental.pallas import tpu as pltpu


def _gated_attn_kernel(x_ref, w_ref, b_ref, o_ref, *, d, compute_dtype):
    # x_ref: (rt, L) input dtype | w_ref: (L, 2D) bf16 | b_ref: (1, 2D) f32
    x = x_ref[...].astype(compute_dtype)          # in-kernel cast (no HBM pre-pass)
    z = jnp.dot(x, w_ref[...], preferred_element_type=jnp.float32)
    z = z + b_ref[...]                            # f32 bias add, broadcast over rows
    a = jnp.tanh(z[:, :d])                        # tanh half    (f32)
    g = jax.nn.sigmoid(z[:, d:])                  # sigmoid half (f32)
    o_ref[...] = (a * g).astype(o_ref.dtype)


def _round_up(n, m):
    return ((n + m - 1) // m) * m


def fuse_params(wa, ba, wb, bb, compute_dtype=jnp.bfloat16):
    """One-time weight prep (hoist out of the per-forward path).

    wa, wb : (L, D)  (transpose of PyTorch nn.Linear.weight)
    ba, bb : (D,) or (1, D)
    Returns w (L, 2D) in compute_dtype and b (1, 2D) in f32.
    """
    L, D = wa.shape
    assert wb.shape == (L, D)
    w = jnp.concatenate([wa, wb], axis=1).astype(compute_dtype)           # (L, 2D)
    b = jnp.concatenate([jnp.reshape(ba, (1, D)),
                         jnp.reshape(bb, (1, D))], axis=1).astype(jnp.float32)
    return w, b


def attn_net_gated_without_fc(x, w, b, *, row_tile=1024,
                              compute_dtype=jnp.bfloat16,
                              out_dtype=jnp.bfloat16):
    """Gated attention MLP: tanh(x@wa+ba) * sigmoid(x@wb+bb).

    x : (N, L)  (any float dtype; cast to compute_dtype inside the kernel)
    w : (L, 2D) fused [wa | wb]   (from fuse_params)
    b : (1, 2D) fused [ba | bb]   (from fuse_params)
    returns (N, D) in out_dtype.
    """
    N, L = x.shape
    two_d = w.shape[1]
    D = two_d // 2
    assert w.shape == (L, two_d) and b.shape == (1, two_d)
    assert L % 128 == 0 and D % 128 == 0, "L and D must be multiples of 128 (lane aligned)"

    # Row tile: multiple of 16 (bf16 sublane packing).  Clamp so the grid has
    # at least 2 steps when there is enough work (keeps both v7x TCs busy).
    if N <= 16:
        rt = N                                   # full-dim block for tiny bags
    else:
        rt = min(int(row_tile), _round_up(pl.cdiv(N, 2), 16))
        rt = max(16, _round_up(rt, 16))
    grid = (pl.cdiv(N, rt),)                     # partial last block handled by Pallas

    kernel = functools.partial(_gated_attn_kernel, d=D, compute_dtype=compute_dtype)

    return pl.pallas_call(
        kernel,
        out_shape=jax.ShapeDtypeStruct((N, D), out_dtype),
        grid=grid,
        in_specs=[
            pl.BlockSpec((rt, L), lambda i: (i, 0)),        # x row tile (pipelined)
            pl.BlockSpec((L, two_d), lambda i: (0, 0)),     # fused weights (resident)
            pl.BlockSpec((1, two_d), lambda i: (0, 0)),     # fused bias   (resident)
        ],
        out_specs=pl.BlockSpec((rt, D), lambda i: (i, 0)),
        compiler_params=pltpu.CompilerParams(
            dimension_semantics=("parallel",),
            vmem_limit_bytes=32 * 1024 * 1024),
    )(x, w, b)


def init_params(key, L, D):
    """Synthetic weights matching nn.Linear(L, D) init; stored as (in, out)."""
    ks = jax.random.split(key, 4)
    bound = 1.0 / jnp.sqrt(L)
    wa = jax.random.uniform(ks[0], (L, D), jnp.float32, -bound, bound)
    ba = jax.random.uniform(ks[1], (D,), jnp.float32, -bound, bound)
    wb = jax.random.uniform(ks[2], (L, D), jnp.float32, -bound, bound)
    bb = jax.random.uniform(ks[3], (D,), jnp.float32, -bound, bound)
    return wa, ba, wb, bb


def reference_forward(x, wa, ba, wb, bb, compute_dtype=jnp.bfloat16):
    """Same math as the kernel (bf16 matmul operands, f32 accumulation/gating)."""
    xc = x.astype(compute_dtype)
    a = jnp.tanh(jnp.dot(xc, wa.astype(compute_dtype),
                         preferred_element_type=jnp.float32) + jnp.reshape(ba, (1, -1)))
    g = jax.nn.sigmoid(jnp.dot(xc, wb.astype(compute_dtype),
                               preferred_element_type=jnp.float32) + jnp.reshape(bb, (1, -1)))
    return a * g


if __name__ == "__main__":
    # Small shapes consistent with the module (real model uses L=1024, D=256).
    # N deliberately NOT a multiple of the row tile to exercise the masked
    # partial-last-block path (no wrapper-side pad anymore).
    N, L, D = 300, 256, 128
    key = jax.random.PRNGKey(0)
    kx, kp = jax.random.split(key)
    x = jax.random.normal(kx, (N, L), jnp.float32)
    wa, ba, wb, bb = init_params(kp, L, D)

    w, b = fuse_params(wa, ba, wb, bb)            # one-time weight prep
    out = attn_net_gated_without_fc(x, w, b, row_tile=256)
    out = jax.block_until_ready(out)

    ref = reference_forward(x, wa, ba, wb, bb)
    assert out.shape == (N, D)
    assert out.dtype == jnp.bfloat16
    err = float(jnp.max(jnp.abs(out.astype(jnp.float32) - ref)))
    # bf16 output rounding (values in [-1, 1]) + bf16-operand matmul => ~4e-3 max.
    assert err < 1.5e-2, f"mismatch vs reference: max abs err {err}"
    print("KERNEL_OK")
</pallas_src>

<mosaic_0001>
module attributes {stable_mosaic.version = 11 : i64} {
  func.func @_gated_attn_kernel(%arg0: i32, %arg1: memref<160x256xf32, #tpu.memory_space<vmem>>, %arg2: memref<256x256xbf16, #tpu.memory_space<vmem>>, %arg3: memref<1x256xf32, #tpu.memory_space<vmem>>, %arg4: memref<160x128xbf16, #tpu.memory_space<vmem>>) attributes {dimension_semantics = [#tpu.dimension_semantics<parallel>], iteration_bounds = array<i64: 2>, scalar_prefetch = 0 : i64, scratch_operands = 0 : i64, tpu.core_type = #tpu.core_type<tc>, window_params = [{transform_indices = @transform_0, window_bounds = array<i64: 160, 256>}, {pipeline_mode = #tpu.pipeline_mode<synchronous>, transform_indices = @transform_1, window_bounds = array<i64: 256, 256>}, {pipeline_mode = #tpu.pipeline_mode<synchronous>, transform_indices = @transform_2, window_bounds = array<i64: 1, 256>}, {transform_indices = @transform_3, window_bounds = array<i64: 160, 128>}]} {
    %c0 = arith.constant 0 : index
    %c0_0 = arith.constant 0 : index
    %0 = vector.load %arg1[%c0, %c0_0] : memref<160x256xf32, #tpu.memory_space<vmem>>, vector<160x256xf32>
    %1 = arith.truncf %0 : vector<160x256xf32> to vector<160x256xbf16>
    %c0_1 = arith.constant 0 : index
    %c0_2 = arith.constant 0 : index
    %2 = vector.load %arg2[%c0_1, %c0_2] : memref<256x256xbf16, #tpu.memory_space<vmem>>, vector<256x256xbf16>
    %cst = arith.constant dense<0.000000e+00> : vector<160x256xf32>
    %3 = tpu.matmul %1, %2, %cst {dimension_numbers = #tpu.dot_dimension_numbers<[1], [0], [0], [1], [0, 0, 1, 1], [], []>} : vector<160x256xbf16>, vector<256x256xbf16>, vector<160x256xf32> -> vector<160x256xf32>
    %c0_3 = arith.constant 0 : index
    %c0_4 = arith.constant 0 : index
    %4 = vector.load %arg3[%c0_3, %c0_4] : memref<1x256xf32, #tpu.memory_space<vmem>>, vector<1x256xf32>
    %5 = vector.broadcast %4 : vector<1x256xf32> to vector<160x256xf32>
    %6 = arith.addf %3, %5 : vector<160x256xf32>
    %7 = vector.extract_strided_slice %6 {offsets = [0, 0], sizes = [160, 128], strides = [1, 1]} : vector<160x256xf32> to vector<160x128xf32>
    %8 = math.tanh %7 : vector<160x128xf32>
    %9 = vector.extract_strided_slice %6 {offsets = [0, 128], sizes = [160, 128], strides = [1, 1]} : vector<160x256xf32> to vector<160x128xf32>
    %10 = arith.negf %9 : vector<160x128xf32>
    %11 = math.exp %10 : vector<160x128xf32>
    %cst_5 = arith.constant 1.000000e+00 : f32
    %12 = vector.broadcast %cst_5 : f32 to vector<160x128xf32>
    %13 = arith.addf %12, %11 : vector<160x128xf32>
    %14 = arith.divf %12, %13 : vector<160x128xf32>
    %15 = arith.mulf %8, %14 : vector<160x128xf32>
    %16 = arith.truncf %15 : vector<160x128xf32> to vector<160x128xbf16>
    %c0_6 = arith.constant 0 : index
    %c0_7 = arith.constant 0 : index
    %17 = vector.load %arg4[%c0_6, %c0_7] : memref<160x128xbf16, #tpu.memory_space<vmem>>, vector<160x128xbf16>
    tpu.vector_store %arg4[%c0_6, %c0_7], %16 {strides = array<i32>} : memref<160x128xbf16, #tpu.memory_space<vmem>>, vector<160x128xbf16>,
    return
  }
  func.func @transform_0(%arg0: i32) -> (i32, i32) {
    %c0_i32 = arith.constant 0 : i32
    %c0_i32_0 = arith.constant 0 : i32
    return %arg0, %c0_i32 : i32, i32
  }
  func.func @transform_1(%arg0: i32) -> (i32, i32) {
    %c0_i32 = arith.constant 0 : i32
    %c0_i32_0 = arith.constant 0 : i32
    %c0_i32_1 = arith.constant 0 : i32
    return %c0_i32, %c0_i32_0 : i32, i32
  }
  func.func @transform_2(%arg0: i32) -> (i32, i32) {
    %c0_i32 = arith.constant 0 : i32
    %c0_i32_0 = arith.constant 0 : i32
    %c0_i32_1 = arith.constant 0 : i32
    return %c0_i32, %c0_i32_0 : i32, i32
  }
  func.func @transform_3(%arg0: i32) -> (i32, i32) {
    %c0_i32 = arith.constant 0 : i32
    %c0_i32_0 = arith.constant 0 : i32
    return %arg0, %c0_i32 : i32, i32
  }
}

</mosaic_0001>

<llo_original>
// kernel: tpu_custom_call.1
$region0: #{tpu_custom_call.1}
  #allocation0 [shape = 'u32[]', space=smem, size = 0x4, offset = 0x4, fixed_abs, tag = 'smem constant byte address 0x4 - core index']
  #allocation1 [shape = 'u32[72,128]{1,0:T(1,128)}', space=vmem, size = 0x9000, scoped, tag = 'internal scratch']
  %s0 = inlined_call_operand.hbm [shape: f32[300,256], index: 0, kind: input, shape index: {}]
  %s1 = inlined_call_operand.hbm [shape: bf16[256,256], index: 1, kind: input, shape index: {}]
  %s2 = inlined_call_operand.hbm [shape: f32[1,256], index: 2, kind: input, shape index: {}]
  %s3 = inlined_call_operand.hbm [shape: bf16[300,128], index: 3, kind: output, shape index: {}]
  %s4 = sld [smem:[#allocation0]]
  $region57: #{tpu_custom_call.1} parent=0
    _
  %s6 = ssub.s32 1, %s4
  %s7 = scalar_select 0, %s6, %s4
  $region1: #{tpu_custom_call.1} parent=0
    #allocation2 [shape = 'u8[327680]{0}', space=vmem, size = 0x50000, scoped, tag = 'input window, operand 0']
    #allocation3 [shape = 's32[2]{0}', space=sflag, size = 0x8, scoped, tag = 'scoped memory for tpu_custom_call.1']
    #allocation4 [shape = 's32[2]{0}', space=sflag, size = 0x8, scoped, tag = 'scoped memory for tpu_custom_call.1']
    #allocation5 [shape = 'u8[131072]{0}', space=vmem, size = 0x20000, scoped, tag = 'input window, operand 1, single buffered']
    #allocation6 [shape = 's32[1]{0}', space=sflag, size = 0x4, scoped, tag = 'scoped memory for tpu_custom_call.1']
    #allocation7 [shape = 'u8[1024]{0}', space=vmem, size = 0x400, scoped, tag = 'input window, operand 2, single buffered']
    #allocation8 [shape = 'u8[81920]{0}', space=vmem, size = 0x14000, scoped, tag = 'output window, operand 0']
    %8 = vsyncpa [#allocation3], 0
    %s9 = scalar_lea.sflag [#allocation3], 1
    %10 = vsyncpa %s9, 0
    %11 = vsyncpa [#allocation6], 0
    %12 = vsyncpa [#allocation4], 0
    %s13 = scalar_lea.sflag [#allocation4], 1
    %14 = vsyncpa %s13, 0
    loop: start=0, step=1, limit=4
    $region2: #{tpu_custom_call.1} parent=1 // loop_pre_header
      _
    $region3: #{tpu_custom_call.1} parent=1 // loop_header
      %s16 = sphi 0, %s20
      %p17 = scmp.ge.s32.totalorder %s16, 4
      %s26 = sphi 0, %s28
      %s29 = sphi 0, %s26
      %s30 = sphi 0, %s29
      %s46 = sphi 0, %s30
      %s50 = sphi 0, %s50
      %s52 = sphi 0, %s50
      %s53 = sphi 0, %s52
      %s67 = sphi 0, %s53
      %s71 = sphi 0, %s71
      %s73 = sphi 0, %s71
      %s74 = sphi 0, %s73
      %s88 = sphi 0, %s74
      %s94 = sphi 0, %s96
      %s97 = sphi 0, %s94
      %s98 = sphi 0, %s97
      %s114 = sphi 0, %s98
    $region4: #{tpu_custom_call.1} parent=1 // loop_header_branch
      %19 = sbr.rel (%p17) target = $region8
    $region5: #{tpu_custom_call.1} parent=1 // loop_body
      %s21 = ssub.s32 %s16, 1
      %s22 = ssub.s32 %s16, 2
      %s23 = sadd.s32 %s16, 1
      %s24 = ssub.s32 %s16, %s23
      %p25 = scmp.eq.s32.totalorder %s24, 0
      %s27 = sadd.s32 %s26, 1
      %s28 = scalar_select %p25, %s26, %s27
      %p31 = pneg %p25
      %p32 = scmp.eq.s32.totalorder %s16, 1
      %p33 = por %p31, %p32
      %p34 = scmp.ne.s32.totalorder %s26, %s29
      %p35 = scmp.eq.s32.totalorder %s16, 0
      %p36 = por %p34, %p35
      %p37 = scmp.ne.s32.totalorder %s26, %s29
      %p38 = scmp.eq.s32.totalorder %s21, 1
      %p39 = por %p37, %p38
      %p40 = scmp.ne.s32.totalorder %s29, %s30
      %p41 = scmp.eq.s32.totalorder %s21, 0
      %p42 = por %p40, %p41
      %p43 = scmp.ne.s32.totalorder %s29, %s30
      %p44 = scmp.eq.s32.totalorder %s22, 1
      %p45 = por %p43, %p44
      %p47 = scmp.ne.s32.totalorder %s30, %s46
      %p48 = scmp.eq.s32.totalorder %s22, 0
      %p49 = por %p47, %p48
      %s51 = sadd.s32 %s50, 1
      %p54 = scmp.eq.s32.totalorder %s16, 1
      %p55 = scmp.ne.s32.totalorder %s50, %s52
      %p56 = scmp.eq.s32.totalorder %s16, 0
      %p57 = por %p55, %p56
      %p58 = scmp.ne.s32.totalorder %s50, %s52
      %p59 = scmp.eq.s32.totalorder %s21, 1
      %p60 = por %p58, %p59
      %p61 = scmp.ne.s32.totalorder %s52, %s53
      %p62 = scmp.eq.s32.totalorder %s21, 0
      %p63 = por %p61, %p62
      %p64 = scmp.ne.s32.totalorder %s52, %s53
      %p65 = scmp.eq.s32.totalorder %s22, 1
      %p66 = por %p64, %p65
      %p68 = scmp.ne.s32.totalorder %s53, %s67
      %p69 = scmp.eq.s32.totalorder %s22, 0
      %p70 = por %p68, %p69
      %s72 = sadd.s32 %s71, 1
      %p75 = scmp.eq.s32.totalorder %s16, 1
      %p76 = scmp.ne.s32.totalorder %s71, %s73
      %p77 = scmp.eq.s32.totalorder %s16, 0
      %p78 = por %p76, %p77
      %p79 = scmp.ne.s32.totalorder %s71, %s73
      %p80 = scmp.eq.s32.totalorder %s21, 1
      %p81 = por %p79, %p80
      %p82 = scmp.ne.s32.totalorder %s73, %s74
      %p83 = scmp.eq.s32.totalorder %s21, 0
      %p84 = por %p82, %p83
      %p85 = scmp.ne.s32.totalorder %s73, %s74
      %p86 = scmp.eq.s32.totalorder %s22, 1
      %p87 = por %p85, %p86
      %p89 = scmp.ne.s32.totalorder %s74, %s88
      %p90 = scmp.eq.s32.totalorder %s22, 0
      %p91 = por %p89, %p90
      %s92 = ssub.s32 %s16, %s23
      %p93 = scmp.eq.s32.totalorder %s92, 0
      %s95 = sadd.s32 %s94, 1
      %s96 = scalar_select %p93, %s94, %s95
      %p99 = pneg %p93
      %p100 = scmp.eq.s32.totalorder %s16, 1
      %p101 = por %p99, %p100
      %p102 = scmp.ne.s32.totalorder %s94, %s97
      %p103 = scmp.eq.s32.totalorder %s16, 0
      %p104 = por %p102, %p103
      %p105 = scmp.ne.s32.totalorder %s94, %s97
      %p106 = scmp.eq.s32.totalorder %s21, 1
      %p107 = por %p105, %p106
      %p108 = scmp.ne.s32.totalorder %s97, %s98
      %p109 = scmp.eq.s32.totalorder %s21, 0
      %p110 = por %p108, %p109
      %p111 = scmp.ne.s32.totalorder %s97, %s98
      %p112 = scmp.eq.s32.totalorder %s22, 1
      %p113 = por %p111, %p112
      %p115 = scmp.ne.s32.totalorder %s98, %s114
      %p116 = scmp.eq.s32.totalorder %s22, 0
      %p117 = por %p115, %p116
      %p118 = scmp.le.s32.totalorder 1, %s16
      %p119 = scmp.lt.s32.totalorder %s16, 3
      %p120 = pnand %p118, %p119
      %p121 = pneg %p120
      // Predicated region
      $region9: #{tpu_custom_call.1} parent=5 // pred_check
        _
      $region10: #{tpu_custom_call.1} parent=5 // pred_check_branch
        %123 = sbr.rel (%p120) target = $region12
      $region11: #{tpu_custom_call.1} parent=5 // pred_region
        %s124 = ssub.s32 %s16, 1
        // Predicated region
        $region13: #{tpu_custom_call.1} parent=11 // pred_check
          %p125 = pneg %p63
        $region14: #{tpu_custom_call.1} parent=11 // pred_check_branch
          %127 = sbr.rel (%p125) target = $region16
        $region15: #{tpu_custom_call.1} parent=11 // pred_region
          %129 = vsyncadd [#allocation6], 0
          %s130 = sshll.u32 %s1, 4
          %s131 = int_to_ptr.hbm [resolvable:$true] %s130
          %s132 = sshll.u32 [#allocation5], 4
          %s133 = int_to_ptr.vmem [resolvable:$true] %s132
          %138 = dma.hbm_to_vmem [thread:$0]  %s131, 4096, %s133, [#allocation6], 128, 128, 8
        $region16: #{tpu_custom_call.1} parent=11 // pred_fallthru
          _
        // Predicated region
        $region17: #{tpu_custom_call.1} parent=11 // pred_check
          %p139 = pneg %p84
        $region18: #{tpu_custom_call.1} parent=11 // pred_check_branch
          %141 = sbr.rel (%p139) target = $region20
        $region19: #{tpu_custom_call.1} parent=11 // pred_region
          %143 = vsyncadd [#allocation6], 0
          %s145 = sshll.u32 %s2, 4
          %s146 = int_to_ptr.hbm [resolvable:$true] %s145
          %s147 = sshll.u32 [#allocation7], 4
          %s148 = int_to_ptr.vmem [resolvable:$true] %s147
          %150 = dma.hbm_to_vmem [thread:$0]  %s146, 32, %s148, [#allocation6]
        $region20: #{tpu_custom_call.1} parent=11 // pred_fallthru
          _
      $region12: #{tpu_custom_call.1} parent=5 // pred_fallthru
        _
      %p151 = scmp.lt.s32.totalorder %s16, 2
      // Predicated region
      $region21: #{tpu_custom_call.1} parent=5 // pred_check
        %p152 = pneg %p151
      $region22: #{tpu_custom_call.1} parent=5 // pred_check_branch
        %154 = sbr.rel (%p152) target = $region24
      $region23: #{tpu_custom_call.1} parent=5 // pred_region
        // Predicated region
        $region25: #{tpu_custom_call.1} parent=23 // pred_check
          %p155 = pneg %p36
        $region26: #{tpu_custom_call.1} parent=23 // pred_check_branch
          %157 = sbr.rel (%p155) target = $region28
        $region27: #{tpu_custom_call.1} parent=23 // pred_region
          %s158 = sand.u32 %s26, 1
          %s159 = scalar_lea.sflag [#allocation3], %s158
          %s160 = sand.u32 %s26, 1
          %s161 = smul.addr %s160, 320
          %s162 = scalar_lea.vmem [#allocation2], %s161
          %s163 = smul.u32 20, %s16
          %s164 = ssub.s32 38, %s163
          %p165 = scmp.lt.s32.totalorder %s164, 20
          %s166 = scalar_select %p165, %s164, 20
          %s167 = smul.u32 8, %s166
          %s168 = smul.u32 %s167, 2
          %s169 = ssub.s32 320, %s168
          %s170 = sshll.u32 %s169, 4
          %171 = vsyncadd %s159, %s170
          %p172 = scmp.ne.s32.totalorder 0, %s168
          %s173 = smul.addr %s163, 2
          %s174 = smul.addr %s173, 8
          %s175 = scalar_lea.hbm %s0, %s174
          %s176 = smul.u32 16, %s166
          %s177 = sshll.u32 %s175, 4
          %s178 = int_to_ptr.hbm [resolvable:$true] %s177
          %s179 = sshll.u32 %s162, 4
          %s180 = int_to_ptr.vmem [resolvable:$true] %s179
          %s181 = sshll.u32 %s176, 4
          %185 = dma.hbm_to_vmem [thread:$0]  (%p172), %s178, %s181, %s180, %s159, 256, 256, 16
        $region28: #{tpu_custom_call.1} parent=23 // pred_fallthru
          _
      $region24: #{tpu_custom_call.1} parent=5 // pred_fallthru
        _
      %p186 = scmp.le.s32.totalorder 1, %s16
      %p187 = scmp.lt.s32.totalorder %s16, 3
      %p188 = pnand %p186, %p187
      %p189 = pneg %p188
      // Predicated region
      $region29: #{tpu_custom_call.1} parent=5 // pred_check
        _
      $region30: #{tpu_custom_call.1} parent=5 // pred_check_branch
        %191 = sbr.rel (%p188) target = $region32
      $region31: #{tpu_custom_call.1} parent=5 // pred_region
        %s192 = ssub.s32 %s16, 1
        %s193 = sand.u32 %s29, 1
        %s194 = scalar_lea.sflag [#allocation3], %s193
        %s195 = sand.u32 %s29, 1
        %s196 = smul.addr %s195, 320
        %s197 = scalar_lea.vmem [#allocation2], %s196
        // Predicated region
        $region33: #{tpu_custom_call.1} parent=31 // pred_check
          %p198 = pneg %p42
        $region34: #{tpu_custom_call.1} parent=31 // pred_check_branch
          %200 = sbr.rel (%p198) target = $region36
        $region35: #{tpu_custom_call.1} parent=31 // pred_region
          %202 = dma.done %s194, 5120
        $region36: #{tpu_custom_call.1} parent=31 // pred_fallthru
          _
        // Predicated region
        $region37: #{tpu_custom_call.1} parent=31 // pred_check
          %p203 = pneg %p63
        $region38: #{tpu_custom_call.1} parent=31 // pred_check_branch
          %205 = sbr.rel (%p203) target = $region40
        $region39: #{tpu_custom_call.1} parent=31 // pred_region
          %207 = dma.done [#allocation6], 4096
        $region40: #{tpu_custom_call.1} parent=31 // pred_fallthru
          _
        // Predicated region
        $region41: #{tpu_custom_call.1} parent=31 // pred_check
          %p208 = pneg %p84
        $region42: #{tpu_custom_call.1} parent=31 // pred_check_branch
          %210 = sbr.rel (%p208) target = $region44
        $region43: #{tpu_custom_call.1} parent=31 // pred_region
          %212 = dma.done [#allocation6], 32
        $region44: #{tpu_custom_call.1} parent=31 // pred_fallthru
          _
        %s213 = sand.u32 %s29, 1
        %s214 = scalar_lea.sflag [#allocation3], %s213
        %s215 = sand.u32 %s29, 1
        %s216 = smul.addr %s215, 320
        %s217 = scalar_lea.vmem [#allocation2], %s216
        %p218 = pneg %p42
        %p219 = pneg %p39
        %p220 = pneg %p63
        %p221 = pneg %p60
        %p222 = pneg %p84
        %p223 = pneg %p81
        %p224 = pneg %p110
        %p225 = pneg %p107
        %s226 = sand.u32 %s97, 1
        %s227 = scalar_lea.sflag [#allocation4], %s226
        %s228 = sand.u32 %s97, 1
        %s229 = smul.addr %s228, 80
        %s230 = scalar_lea.vmem [#allocation8], %s229
        %s231 = smul.u32 20, %s21
        %s232 = ssub.s32 38, %s231
        %p233 = scmp.lt.s32.totalorder %s232, 20
        %s234 = scalar_select %p233, %s232, 20
        %s235 = smul.u32 8, %s234
        %s236 = smul.u32 %s235, 2
        %s237 = smul.u32 20, %s21
        %s238 = ssub.s32 38, %s237
        %p239 = scmp.lt.s32.totalorder %s238, 20
        %s240 = scalar_select %p239, %s238, 20
        %s241 = smul.u32 4, %s240
        %v242 = vld [vmem:[%s197] sm:$0xff]
        %v243 = vld [vmem:[%s197 + $0x8] sm:$0xff]
        %v244 = vld [vmem:[%s197 + $0x10] sm:$0xff]
        %v245 = vld [vmem:[%s197 + $0x18] sm:$0xff]
        %v246 = vld [vmem:[%s197 + $0x20] sm:$0xff]
        %v247 = vld [vmem:[%s197 + $0x28] sm:$0xff]
        %v248 = vld [vmem:[%s197 + $0x30] sm:$0xff]
        %v249 = vld [vmem:[%s197 + $0x38] sm:$0xff]
        %v250 = vld [vmem:[%s197 + $0x40] sm:$0xff]
        %v251 = vld [vmem:[%s197 + $0x48] sm:$0xff]
        %v252 = vld [vmem:[%s197 + $0x50] sm:$0xff]
        %v253 = vld [vmem:[%s197 + $0x58] sm:$0xff]
        %v254 = vld [vmem:[%s197 + $0x60] sm:$0xff]
        %v255 = vld [vmem:[%s197 + $0x68] sm:$0xff]
        %v256 = vld [vmem:[%s197 + $0x70] sm:$0xff]
        %v257 = vld [vmem:[%s197 + $0x78] sm:$0xff]
        %v258 = vld [vmem:[%s197 + $0x80] sm:$0xff]
        %v259 = vld [vmem:[%s197 + $0x88] sm:$0xff]
        %v260 = vld [vmem:[%s197 + $0x90] sm:$0xff]
        %v261 = vld [vmem:[%s197 + $0x98] sm:$0xff]
        %v262 = vld [vmem:[%s197 + $0xa0] sm:$0xff]
        %v263 = vld [vmem:[%s197 + $0xa8] sm:$0xff]
        %v264 = vld [vmem:[%s197 + $0xb0] sm:$0xff]
        %v265 = vld [vmem:[%s197 + $0xb8] sm:$0xff]
        %v266 = vld [vmem:[%s197 + $0xc0] sm:$0xff]
        %v267 = vld [vmem:[%s197 + $0xc8] sm:$0xff]
        %v268 = vld [vmem:[%s197 + $0xd0] sm:$0xff]
        %v269 = vld [vmem:[%s197 + $0xd8] sm:$0xff]
        %v270 = vld [vmem:[%s197 + $0xe0] sm:$0xff]
        %v271 = vld [vmem:[%s197 + $0xe8] sm:$0xff]
        %v272 = vld [vmem:[%s197 + $0xf0] sm:$0xff]
        %v273 = vld [vmem:[%s197 + $0xf8] sm:$0xff]
        %v274 = vld [vmem:[%s197 + $0x100] sm:$0xff]
        %v275 = vld [vmem:[%s197 + $0x108] sm:$0xff]
        %v276 = vld [vmem:[%s197 + $0x110] sm:$0xff]
        %v277 = vld [vmem:[%s197 + $0x118] sm:$0xff]
        %v278 = vld [vmem:[%s197 + $0x120] sm:$0xff]
        %v279 = vld [vmem:[%s197 + $0x128] sm:$0xff]
        %v280 = vld [vmem:[%s197 + $0x130] sm:$0xff]
        %v281 = vld [vmem:[%s197 + $0x138] sm:$0xff]
        %v282 = vpack.c.bf16 %v244, %v242
        %v283 = vpack.c.bf16 %v245, %v243
        %v284 = vpack.c.bf16 %v248, %v246
        %v285 = vpack.c.bf16 %v249, %v247
        %v286 = vpack.c.bf16 %v252, %v250
        %v287 = vpack.c.bf16 %v253, %v251
        %v288 = vpack.c.bf16 %v256, %v254
        %v289 = vpack.c.bf16 %v257, %v255
        %v290 = vpack.c.bf16 %v260, %v258
        %v291 = vpack.c.bf16 %v261, %v259
        %v292 = vpack.c.bf16 %v264, %v262
        %v293 = vpack.c.bf16 %v265, %v263
        %v294 = vpack.c.bf16 %v268, %v266
        %v295 = vpack.c.bf16 %v269, %v267
        %v296 = vpack.c.bf16 %v272, %v270
        %v297 = vpack.c.bf16 %v273, %v271
        %v298 = vpack.c.bf16 %v276, %v274
        %v299 = vpack.c.bf16 %v277, %v275
        %v300 = vpack.c.bf16 %v280, %v278
        %v301 = vpack.c.bf16 %v281, %v279
        %v302 = vld [vmem:[#allocation5] sm:$0xff]
        %v303 = vld [vmem:[#allocation5 + $0x8] sm:$0xff]
        %v304 = vld [vmem:[#allocation5 + $0x10] sm:$0xff]
        %v305 = vld [vmem:[#allocation5 + $0x18] sm:$0xff]
        %v306 = vld [vmem:[#allocation5 + $0x20] sm:$0xff]
        %v307 = vld [vmem:[#allocation5 + $0x28] sm:$0xff]
        %v308 = vld [vmem:[#allocation5 + $0x30] sm:$0xff]
        %v309 = vld [vmem:[#allocation5 + $0x38] sm:$0xff]
        %v310 = vld [vmem:[#allocation5 + $0x40] sm:$0xff]
        %v311 = vld [vmem:[#allocation5 + $0x48] sm:$0xff]
        %v312 = vld [vmem:[#allocation5 + $0x50] sm:$0xff]
        %v313 = vld [vmem:[#allocation5 + $0x58] sm:$0xff]
        %v314 = vld [vmem:[#allocation5 + $0x60] sm:$0xff]
        %v315 = vld [vmem:[#allocation5 + $0x68] sm:$0xff]
        %v316 = vld [vmem:[#allocation5 + $0x70] sm:$0xff]
        %v317 = vld [vmem:[#allocation5 + $0x78] sm:$0xff]
        %v318 = vld [vmem:[#allocation5 + $0x80] sm:$0xff]
        %v319 = vld [vmem:[#allocation5 + $0x88] sm:$0xff]
        %v320 = vld [vmem:[#allocation5 + $0x90] sm:$0xff]
        %v321 = vld [vmem:[#allocation5 + $0x98] sm:$0xff]
        %v322 = vld [vmem:[#allocation5 + $0xa0] sm:$0xff]
        %v323 = vld [vmem:[#allocation5 + $0xa8] sm:$0xff]
        %v324 = vld [vmem:[#allocation5 + $0xb0] sm:$0xff]
        %v325 = vld [vmem:[#allocation5 + $0xb8] sm:$0xff]
        %v326 = vld [vmem:[#allocation5 + $0xc0] sm:$0xff]
        %v327 = vld [vmem:[#allocation5 + $0xc8] sm:$0xff]
        %v328 = vld [vmem:[#allocation5 + $0xd0] sm:$0xff]
        %v329 = vld [vmem:[#allocation5 + $0xd8] sm:$0xff]
        %v330 = vld [vmem:[#allocation5 + $0xe0] sm:$0xff]
        %v331 = vld [vmem:[#allocation5 + $0xe8] sm:$0xff]
        %v332 = vld [vmem:[#allocation5 + $0xf0] sm:$0xff]
        %v333 = vld [vmem:[#allocation5 + $0xf8] sm:$0xff]
        %v334 = vld [vmem:[#allocation7] sm:$0x3]
        %v336 = vperm.slane %v334, 0
        %v337 = vperm.slane %v334, 1
        %v372 = vunpack.c.l.b16 %v302
        %v373 = vunpack.c.h.b16 %v302
        %v374 = vunpack.c.l.b16 %v303
        %v375 = vunpack.c.h.b16 %v303
        %v376 = vunpack.c.l.b16 %v304
        %v377 = vunpack.c.h.b16 %v304
        %v378 = vunpack.c.l.b16 %v305
        %v379 = vunpack.c.h.b16 %v305
        %v380 = vunpack.c.l.b16 %v306
        %v381 = vunpack.c.h.b16 %v306
        %v382 = vunpack.c.l.b16 %v307
        %v383 = vunpack.c.h.b16 %v307
        %v384 = vunpack.c.l.b16 %v308
        %v385 = vunpack.c.h.b16 %v308
        %v386 = vunpack.c.l.b16 %v309
        %v387 = vunpack.c.h.b16 %v309
        %v388 = vunpack.c.l.b16 %v310
        %v389 = vunpack.c.h.b16 %v310
        %v390 = vunpack.c.l.b16 %v311
        %v391 = vunpack.c.h.b16 %v311
        %v392 = vunpack.c.l.b16 %v312
        %v393 = vunpack.c.h.b16 %v312
        %v394 = vunpack.c.l.b16 %v313
        %v395 = vunpack.c.h.b16 %v313
        %v396 = vunpack.c.l.b16 %v314
        %v397 = vunpack.c.h.b16 %v314
        %v398 = vunpack.c.l.b16 %v315
        %v399 = vunpack.c.h.b16 %v315
        %v400 = vunpack.c.l.b16 %v316
        %v401 = vunpack.c.h.b16 %v316
        %v402 = vunpack.c.l.b16 %v317
        %v403 = vunpack.c.h.b16 %v317
        %v404 = vunpack.c.l.b16 %v318
        %v405 = vunpack.c.h.b16 %v318
        %v406 = vunpack.c.l.b16 %v319
        %v407 = vunpack.c.h.b16 %v319
        %v408 = vunpack.c.l.b16 %v320
        %v409 = vunpack.c.h.b16 %v320
        %v410 = vunpack.c.l.b16 %v321
        %v411 = vunpack.c.h.b16 %v321
        %v412 = vunpack.c.l.b16 %v322
        %v413 = vunpack.c.h.b16 %v322
        %v414 = vunpack.c.l.b16 %v323
        %v415 = vunpack.c.h.b16 %v323
        %v416 = vunpack.c.l.b16 %v324
        %v417 = vunpack.c.h.b16 %v324
        %v418 = vunpack.c.l.b16 %v325
        %v419 = vunpack.c.h.b16 %v325
        %v420 = vunpack.c.l.b16 %v326
        %v421 = vunpack.c.h.b16 %v326
        %v422 = vunpack.c.l.b16 %v327
        %v423 = vunpack.c.h.b16 %v327
        %v424 = vunpack.c.l.b16 %v328
        %v425 = vunpack.c.h.b16 %v328
        %v426 = vunpack.c.l.b16 %v329
        %v427 = vunpack.c.h.b16 %v329
        %v428 = vunpack.c.l.b16 %v330
        %v429 = vunpack.c.h.b16 %v330
        %v430 = vunpack.c.l.b16 %v331
        %v431 = vunpack.c.h.b16 %v331
        %v432 = vunpack.c.l.b16 %v332
        %v433 = vunpack.c.h.b16 %v332
        %v434 = vunpack.c.l.b16 %v333
        %v435 = vunpack.c.h.b16 %v333
        %v436 = vpack.c.b16 %v374, %v372
        %v437 = vpack.c.b16 %v375, %v373
        %v438 = vpack.c.b16 %v378, %v376
        %v439 = vpack.c.b16 %v379, %v377
        %v440 = vpack.c.b16 %v382, %v380
        %v441 = vpack.c.b16 %v383, %v381
        %v442 = vpack.c.b16 %v386, %v384
        %v443 = vpack.c.b16 %v387, %v385
        %v444 = vpack.c.b16 %v390, %v388
        %v445 = vpack.c.b16 %v391, %v389
        %v446 = vpack.c.b16 %v394, %v392
        %v447 = vpack.c.b16 %v395, %v393
        %v448 = vpack.c.b16 %v398, %v396
        %v449 = vpack.c.b16 %v399, %v397
        %v450 = vpack.c.b16 %v402, %v400
        %v451 = vpack.c.b16 %v403, %v401
        %v452 = vpack.c.b16 %v406, %v404
        %v453 = vpack.c.b16 %v407, %v405
        %v454 = vpack.c.b16 %v410, %v408
        %v455 = vpack.c.b16 %v411, %v409
        %v456 = vpack.c.b16 %v414, %v412
        %v457 = vpack.c.b16 %v415, %v413
        %v458 = vpack.c.b16 %v418, %v416
        %v459 = vpack.c.b16 %v419, %v417
        %v460 = vpack.c.b16 %v422, %v420
        %v461 = vpack.c.b16 %v423, %v421
        %v462 = vpack.c.b16 %v426, %v424
        %v463 = vpack.c.b16 %v427, %v425
        %v464 = vpack.c.b16 %v430, %v428
        %v465 = vpack.c.b16 %v431, %v429
        %v466 = vpack.c.b16 %v434, %v432
        %v467 = vpack.c.b16 %v435, %v433
        %500 = vmatpush.bf16.msra.mxu0 %v450
        %501 = vmatpush.bf16.msra.mxu0 %v448
        %502 = vmatpush.bf16.msra.mxu0 %v446
        %503 = vmatpush.bf16.msra.mxu0 %v444
        %504 = vmatpush.bf16.msra.mxu0 %v442
        %505 = vmatpush.bf16.msra.mxu0 %v440
        %506 = vmatpush.bf16.msra.mxu0 %v438
        %507 = vmatpush.bf16.msra.mxu0 %v436
        %508 = vmatmul.bf16.gmra.mxu0 %v282
        %v509 = vpop.f32.mrf.mxu0
        %v510 = vadd.f32 %v336, %v509
        %v511 = vpop.f32.mrf.mxu0
        %v512 = vadd.f32 %v336, %v511
        %513 = vmatmul.bf16.gmra.mxu0 %v284
        %v514 = vpop.f32.mrf.mxu0
        %v515 = vadd.f32 %v336, %v514
        %v516 = vpop.f32.mrf.mxu0
        %v517 = vadd.f32 %v336, %v516
        %518 = vmatmul.bf16.gmra.mxu0 %v286
        %v519 = vpop.f32.mrf.mxu0
        %v520 = vadd.f32 %v336, %v519
        %v521 = vpop.f32.mrf.mxu0
        %v522 = vadd.f32 %v336, %v521
        %523 = vmatmul.bf16.gmra.mxu0 %v288
        %v524 = vpop.f32.mrf.mxu0
        %v525 = vadd.f32 %v336, %v524
        %v526 = vpop.f32.mrf.mxu0
        %v527 = vadd.f32 %v336, %v526
        %528 = vmatmul.bf16.gmra.mxu0 %v290
        %v529 = vpop.f32.mrf.mxu0
        %v530 = vadd.f32 %v336, %v529
        %v531 = vpop.f32.mrf.mxu0
        %v532 = vadd.f32 %v336, %v531
        %533 = vmatmul.bf16.gmra.mxu0 %v292
        %v534 = vpop.f32.mrf.mxu0
        %v535 = vadd.f32 %v336, %v534
        %v536 = vpop.f32.mrf.mxu0
        %v537 = vadd.f32 %v336, %v536
        %538 = vmatmul.bf16.gmra.mxu0 %v294
        %v539 = vpop.f32.mrf.mxu0
        %v540 = vadd.f32 %v336, %v539
        %v541 = vpop.f32.mrf.mxu0
        %v542 = vadd.f32 %v336, %v541
        %543 = vmatmul.bf16.gmra.mxu0 %v296
        %v544 = vpop.f32.mrf.mxu0
        %v545 = vadd.f32 %v336, %v544
        %v546 = vpop.f32.mrf.mxu0
        %v547 = vadd.f32 %v336, %v546
        %548 = vmatmul.bf16.gmra.mxu0 %v298
        %v549 = vpop.f32.mrf.mxu0
        %v550 = vadd.f32 %v336, %v549
        %v551 = vpop.f32.mrf.mxu0
        %v552 = vadd.f32 %v336, %v551
        %553 = vmatmul.bf16.gmra.mxu0 %v300
        %v554 = vpop.f32.mrf.mxu0
        %v555 = vadd.f32 %v336, %v554
        %v556 = vpop.f32.mrf.mxu0
        %v557 = vadd.f32 %v336, %v556
        %558 = vdwg.mxu0
        %559 = vmatpush.bf16.msra.mxu0 %v466
        %560 = vmatpush.bf16.msra.mxu0 %v464
        %561 = vmatpush.bf16.msra.mxu0 %v462
        %562 = vmatpush.bf16.msra.mxu0 %v460
        %563 = vmatpush.bf16.msra.mxu0 %v458
        %564 = vmatpush.bf16.msra.mxu0 %v456
        %565 = vmatpush.bf16.msra.mxu0 %v454
        %566 = vmatpush.bf16.msra.mxu0 %v452
        %567 = vmatmul.bf16.gmra.mxu0 %v283
        %v568 = vpop.f32.mrf.mxu0
        %v569 = vadd.f32 %v510, %v568
        %v570 = vpop.f32.mrf.mxu0
        %v571 = vadd.f32 %v512, %v570
        %572 = vmatmul.bf16.gmra.mxu0 %v285
        %v573 = vpop.f32.mrf.mxu0
        %v574 = vadd.f32 %v515, %v573
        %v575 = vpop.f32.mrf.mxu0
        %v576 = vadd.f32 %v517, %v575
        %577 = vmatmul.bf16.gmra.mxu0 %v287
        %v578 = vpop.f32.mrf.mxu0
        %v579 = vadd.f32 %v520, %v578
        %v580 = vpop.f32.mrf.mxu0
        %v581 = vadd.f32 %v522, %v580
        %582 = vmatmul.bf16.gmra.mxu0 %v289
        %v583 = vpop.f32.mrf.mxu0
        %v584 = vadd.f32 %v525, %v583
        %v585 = vpop.f32.mrf.mxu0
        %v586 = vadd.f32 %v527, %v585
        %587 = vmatmul.bf16.gmra.mxu0 %v291
        %v588 = vpop.f32.mrf.mxu0
        %v589 = vadd.f32 %v530, %v588
        %v590 = vpop.f32.mrf.mxu0
        %v591 = vadd.f32 %v532, %v590
        %592 = vmatmul.bf16.gmra.mxu0 %v293
        %v593 = vpop.f32.mrf.mxu0
        %v594 = vadd.f32 %v535, %v593
        %v595 = vpop.f32.mrf.mxu0
        %v596 = vadd.f32 %v537, %v595
        %597 = vmatmul.bf16.gmra.mxu0 %v295
        %v598 = vpop.f32.mrf.mxu0
        %v599 = vadd.f32 %v540, %v598
        %v600 = vpop.f32.mrf.mxu0
        %v601 = vadd.f32 %v542, %v600
        %602 = vmatmul.bf16.gmra.mxu0 %v297
        %v603 = vpop.f32.mrf.mxu0
        %v604 = vadd.f32 %v545, %v603
        %v605 = vpop.f32.mrf.mxu0
        %v606 = vadd.f32 %v547, %v605
        %607 = vmatmul.bf16.gmra.mxu0 %v299
        %v608 = vpop.f32.mrf.mxu0
        %v609 = vadd.f32 %v550, %v608
        %v610 = vpop.f32.mrf.mxu0
        %v611 = vadd.f32 %v552, %v610
        %612 = vmatmul.bf16.gmra.mxu0 %v301
        %v613 = vpop.f32.mrf.mxu0
        %v614 = vadd.f32 %v555, %v613
        %v615 = vpop.f32.mrf.mxu0
        %v616 = vadd.f32 %v557, %v615
        %617 = vdwg.mxu0
        %618 = vmatpush.bf16.msra.mxu0 %v451
        %619 = vmatpush.bf16.msra.mxu0 %v449
        %620 = vmatpush.bf16.msra.mxu0 %v447
        %621 = vmatpush.bf16.msra.mxu0 %v445
        %622 = vmatpush.bf16.msra.mxu0 %v443
        %623 = vmatpush.bf16.msra.mxu0 %v441
        %624 = vmatpush.bf16.msra.mxu0 %v439
        %625 = vmatpush.bf16.msra.mxu0 %v437
        %626 = vmatmul.bf16.gmra.mxu0 %v282
        %v627 = vpop.f32.mrf.mxu0
        %v628 = vadd.f32 %v337, %v627
        %v629 = vpop.f32.mrf.mxu0
        %v630 = vadd.f32 %v337, %v629
        %631 = vmatmul.bf16.gmra.mxu0 %v284
        %v632 = vpop.f32.mrf.mxu0
        %v633 = vadd.f32 %v337, %v632
        %v634 = vpop.f32.mrf.mxu0
        %v635 = vadd.f32 %v337, %v634
        %636 = vmatmul.bf16.gmra.mxu0 %v286
        %v637 = vpop.f32.mrf.mxu0
        %v638 = vadd.f32 %v337, %v637
        %v639 = vpop.f32.mrf.mxu0
        %v640 = vadd.f32 %v337, %v639
        %641 = vmatmul.bf16.gmra.mxu0 %v288
        %v642 = vpop.f32.mrf.mxu0
        %v643 = vadd.f32 %v337, %v642
        %v644 = vpop.f32.mrf.mxu0
        %v645 = vadd.f32 %v337, %v644
        %646 = vmatmul.bf16.gmra.mxu0 %v290
        %v647 = vpop.f32.mrf.mxu0
        %v648 = vadd.f32 %v337, %v647
        %v649 = vpop.f32.mrf.mxu0
        %v650 = vadd.f32 %v337, %v649
        %651 = vmatmul.bf16.gmra.mxu0 %v292
        %v652 = vpop.f32.mrf.mxu0
        %v653 = vadd.f32 %v337, %v652
        %v654 = vpop.f32.mrf.mxu0
        %v655 = vadd.f32 %v337, %v654
        %656 = vmatmul.bf16.gmra.mxu0 %v294
        %v657 = vpop.f32.mrf.mxu0
        %v658 = vadd.f32 %v337, %v657
        %v659 = vpop.f32.mrf.mxu0
        %v660 = vadd.f32 %v337, %v659
        %661 = vmatmul.bf16.gmra.mxu0 %v296
        %v662 = vpop.f32.mrf.mxu0
        %v663 = vadd.f32 %v337, %v662
        %v664 = vpop.f32.mrf.mxu0
        %v665 = vadd.f32 %v337, %v664
        %666 = vmatmul.bf16.gmra.mxu0 %v298
        %v667 = vpop.f32.mrf.mxu0
        %v668 = vadd.f32 %v337, %v667
        %v669 = vpop.f32.mrf.mxu0
        %v670 = vadd.f32 %v337, %v669
        %671 = vmatmul.bf16.gmra.mxu0 %v300
        %v672 = vpop.f32.mrf.mxu0
        %v673 = vadd.f32 %v337, %v672
        %v674 = vpop.f32.mrf.mxu0
        %v675 = vadd.f32 %v337, %v674
        %676 = vdwg.mxu0
        %677 = vmatpush.bf16.msra.mxu0 %v467
        %678 = vmatpush.bf16.msra.mxu0 %v465
        %679 = vmatpush.bf16.msra.mxu0 %v463
        %680 = vmatpush.bf16.msra.mxu0 %v461
        %681 = vmatpush.bf16.msra.mxu0 %v459
        %682 = vmatpush.bf16.msra.mxu0 %v457
        %683 = vmatpush.bf16.msra.mxu0 %v455
        %684 = vmatpush.bf16.msra.mxu0 %v453
        %685 = vmatmul.bf16.gmra.mxu0 %v283
        %v686 = vpop.f32.mrf.mxu0
        %v687 = vadd.f32 %v628, %v686
        %v688 = vpop.f32.mrf.mxu0
        %v689 = vadd.f32 %v630, %v688
        %690 = vmatmul.bf16.gmra.mxu0 %v285
        %v691 = vpop.f32.mrf.mxu0
        %v692 = vadd.f32 %v633, %v691
        %v693 = vpop.f32.mrf.mxu0
        %v694 = vadd.f32 %v635, %v693
        %695 = vmatmul.bf16.gmra.mxu0 %v287
        %v696 = vpop.f32.mrf.mxu0
        %v697 = vadd.f32 %v638, %v696
        %v698 = vpop.f32.mrf.mxu0
        %v699 = vadd.f32 %v640, %v698
        %700 = vmatmul.bf16.gmra.mxu0 %v289
        %v701 = vpop.f32.mrf.mxu0
        %v702 = vadd.f32 %v643, %v701
        %v703 = vpop.f32.mrf.mxu0
        %v704 = vadd.f32 %v645, %v703
        %705 = vmatmul.bf16.gmra.mxu0 %v291
        %v706 = vpop.f32.mrf.mxu0
        %v707 = vadd.f32 %v648, %v706
        %v708 = vpop.f32.mrf.mxu0
        %v709 = vadd.f32 %v650, %v708
        %710 = vmatmul.bf16.gmra.mxu0 %v293
        %v711 = vpop.f32.mrf.mxu0
        %v712 = vadd.f32 %v653, %v711
        %v713 = vpop.f32.mrf.mxu0
        %v714 = vadd.f32 %v655, %v713
        %715 = vmatmul.bf16.gmra.mxu0 %v295
        %v716 = vpop.f32.mrf.mxu0
        %v717 = vadd.f32 %v658, %v716
        %v718 = vpop.f32.mrf.mxu0
        %v719 = vadd.f32 %v660, %v718
        %720 = vmatmul.bf16.gmra.mxu0 %v297
        %v721 = vpop.f32.mrf.mxu0
        %v722 = vadd.f32 %v663, %v721
        %v723 = vpop.f32.mrf.mxu0
        %v724 = vadd.f32 %v665, %v723
        %725 = vmatmul.bf16.gmra.mxu0 %v299
        %v726 = vpop.f32.mrf.mxu0
        %v727 = vadd.f32 %v668, %v726
        %v728 = vpop.f32.mrf.mxu0
        %v729 = vadd.f32 %v670, %v728
        %730 = vmatmul.bf16.gmra.mxu0 %v301
        %v731 = vpop.f32.mrf.mxu0
        %v732 = vadd.f32 %v673, %v731
        %v733 = vpop.f32.mrf.mxu0
        %v734 = vadd.f32 %v675, %v733
        %735 = vdwg.mxu0
        %v736 = vtanh.pop %v569
        %v737 = vtanh.pop %v571
        %v738 = vtanh.pop %v574
        %v739 = vtanh.pop %v576
        %v740 = vtanh.pop %v579
        %v741 = vtanh.pop %v581
        %v742 = vtanh.pop %v584
        %v743 = vtanh.pop %v586
        %v744 = vtanh.pop %v589
        %v745 = vtanh.pop %v591
        %v746 = vtanh.pop %v594
        %v747 = vtanh.pop %v596
        %v748 = vtanh.pop %v599
        %v749 = vtanh.pop %v601
        %v750 = vtanh.pop %v604
        %v751 = vtanh.pop %v606
        %v752 = vtanh.pop %v609
        %v753 = vtanh.pop %v611
        %v754 = vtanh.pop %v614
        %v755 = vtanh.pop %v616
        %v756 = vxor.u32 %v687, 2147483648
        %v757 = vxor.u32 %v689, 2147483648
        %v758 = vxor.u32 %v692, 2147483648
        %v759 = vxor.u32 %v694, 2147483648
        %v760 = vxor.u32 %v697, 2147483648
        %v761 = vxor.u32 %v699, 2147483648
        %v762 = vxor.u32 %v702, 2147483648
        %v763 = vxor.u32 %v704, 2147483648
        %v764 = vxor.u32 %v707, 2147483648
        %v765 = vxor.u32 %v709, 2147483648
        %v766 = vxor.u32 %v712, 2147483648
        %v767 = vxor.u32 %v714, 2147483648
        %v768 = vxor.u32 %v717, 2147483648
        %v769 = vxor.u32 %v719, 2147483648
        %v770 = vxor.u32 %v722, 2147483648
        %v771 = vxor.u32 %v724, 2147483648
        %v772 = vxor.u32 %v727, 2147483648
        %v773 = vxor.u32 %v729, 2147483648
        %v774 = vxor.u32 %v732, 2147483648
        %v775 = vxor.u32 %v734, 2147483648
        %v776 = vmul.f32 %v756, 1.442695
        %v777 = vpow.pop %v776
        %v778 = vmul.f32 %v757, 1.442695
        %v779 = vpow.pop %v778
        %v780 = vmul.f32 %v758, 1.442695
        %v781 = vpow.pop %v780
        %v782 = vmul.f32 %v759, 1.442695
        %v783 = vpow.pop %v782
        %v784 = vmul.f32 %v760, 1.442695
        %v785 = vpow.pop %v784
        %v786 = vmul.f32 %v761, 1.442695
        %v787 = vpow.pop %v786
        %v788 = vmul.f32 %v762, 1.442695
        %v789 = vpow.pop %v788
        %v790 = vmul.f32 %v763, 1.442695
        %v791 = vpow.pop %v790
        %v792 = vmul.f32 %v764, 1.442695
        %v793 = vpow.pop %v792
        %v794 = vmul.f32 %v765, 1.442695
        %v795 = vpow.pop %v794
        %v796 = vmul.f32 %v766, 1.442695
        %v797 = vpow.pop %v796
        %v798 = vmul.f32 %v767, 1.442695
        %v799 = vpow.pop %v798
        %v800 = vmul.f32 %v768, 1.442695
        %v801 = vpow.pop %v800
        %v802 = vmul.f32 %v769, 1.442695
        %v803 = vpow.pop %v802
        %v804 = vmul.f32 %v770, 1.442695
        %v805 = vpow.pop %v804
        %v806 = vmul.f32 %v771, 1.442695
        %v807 = vpow.pop %v806
        %v808 = vmul.f32 %v772, 1.442695
        %v809 = vpow.pop %v808
        %v810 = vmul.f32 %v773, 1.442695
        %v811 = vpow.pop %v810
        %v812 = vmul.f32 %v774, 1.442695
        %v813 = vpow.pop %v812
        %v814 = vmul.f32 %v775, 1.442695
        %v815 = vpow.pop %v814
        %v816 = vadd.f32 %v777, 1.0
        %v817 = vadd.f32 %v779, 1.0
        %v818 = vadd.f32 %v781, 1.0
        %v819 = vadd.f32 %v783, 1.0
        %v820 = vadd.f32 %v785, 1.0
        %v821 = vadd.f32 %v787, 1.0
        %v822 = vadd.f32 %v789, 1.0
        %v823 = vadd.f32 %v791, 1.0
        %v824 = vadd.f32 %v793, 1.0
        %v825 = vadd.f32 %v795, 1.0
        %v826 = vadd.f32 %v797, 1.0
        %v827 = vadd.f32 %v799, 1.0
        %v828 = vadd.f32 %v801, 1.0
        %v829 = vadd.f32 %v803, 1.0
        %v830 = vadd.f32 %v805, 1.0
        %v831 = vadd.f32 %v807, 1.0
        %v832 = vadd.f32 %v809, 1.0
        %v833 = vadd.f32 %v811, 1.0
        %v834 = vadd.f32 %v813, 1.0
        %v835 = vadd.f32 %v815, 1.0
        %v836 = vrcp.pop %v816
        %v837 = vmul.f32 %v816, %v836
        %v838 = vsub.f32 1.0, %v837
        %v839 = vmul.f32 %v836, %v838
        %v840 = vadd.f32 %v836, %v839
        %vm841 = vweird.f32 %v816
        %vm842 = vweird.f32 %v836
        %vm843 = vmor %vm841, %vm842
        %v844 = vsel %vm843, %v836, %v840
        %v845 = vand.u32 2147483647, %v816
        %vm846 = vcmp.eq.f32.partialorder %v845, 8.507059e+37
        %v847 = vand.u32 %v816, 2147483648
        %v848 = vor.u32 1.1754944e-38, %v847
        %v849 = vsel %vm846, %v848, %v844
        %v850 = vmul.f32 1.0, %v849
        %v851 = vrcp.pop %v817
        %v852 = vmul.f32 %v817, %v851
        %v853 = vsub.f32 1.0, %v852
        %v854 = vmul.f32 %v851, %v853
        %v855 = vadd.f32 %v851, %v854
        %vm856 = vweird.f32 %v817
        %vm857 = vweird.f32 %v851
        %vm858 = vmor %vm856, %vm857
        %v859 = vsel %vm858, %v851, %v855
        %v860 = vand.u32 2147483647, %v817
        %vm861 = vcmp.eq.f32.partialorder %v860, 8.507059e+37
        %v862 = vand.u32 %v817, 2147483648
        %v863 = vor.u32 1.1754944e-38, %v862
        %v864 = vsel %vm861, %v863, %v859
        %v865 = vmul.f32 1.0, %v864
        %v866 = vrcp.pop %v818
        %v867 = vmul.f32 %v818, %v866
        %v868 = vsub.f32 1.0, %v867
        %v869 = vmul.f32 %v866, %v868
        %v870 = vadd.f32 %v866, %v869
        %vm871 = vweird.f32 %v818
        %vm872 = vweird.f32 %v866
        %vm873 = vmor %vm871, %vm872
        %v874 = vsel %vm873, %v866, %v870
        %v875 = vand.u32 2147483647, %v818
        %vm876 = vcmp.eq.f32.partialorder %v875, 8.507059e+37
        %v877 = vand.u32 %v818, 2147483648
        %v878 = vor.u32 1.1754944e-38, %v877
        %v879 = vsel %vm876, %v878, %v874
        %v880 = vmul.f32 1.0, %v879
        %v881 = vrcp.pop %v819
        %v882 = vmul.f32 %v819, %v881
        %v883 = vsub.f32 1.0, %v882
        %v884 = vmul.f32 %v881, %v883
        %v885 = vadd.f32 %v881, %v884
        %vm886 = vweird.f32 %v819
        %vm887 = vweird.f32 %v881
        %vm888 = vmor %vm886, %vm887
        %v889 = vsel %vm888, %v881, %v885
        %v890 = vand.u32 2147483647, %v819
        %vm891 = vcmp.eq.f32.partialorder %v890, 8.507059e+37
        %v892 = vand.u32 %v819, 2147483648
        %v893 = vor.u32 1.1754944e-38, %v892
        %v894 = vsel %vm891, %v893, %v889
        %v895 = vmul.f32 1.0, %v894
        %v896 = vrcp.pop %v820
        %v897 = vmul.f32 %v820, %v896
        %v898 = vsub.f32 1.0, %v897
        %v899 = vmul.f32 %v896, %v898
        %v900 = vadd.f32 %v896, %v899
        %vm901 = vweird.f32 %v820
        %vm902 = vweird.f32 %v896
        %vm903 = vmor %vm901, %vm902
        %v904 = vsel %vm903, %v896, %v900
        %v905 = vand.u32 2147483647, %v820
        %vm906 = vcmp.eq.f32.partialorder %v905, 8.507059e+37
        %v907 = vand.u32 %v820, 2147483648
        %v908 = vor.u32 1.1754944e-38, %v907
        %v909 = vsel %vm906, %v908, %v904
        %v910 = vmul.f32 1.0, %v909
        %v911 = vrcp.pop %v821
        %v912 = vmul.f32 %v821, %v911
        %v913 = vsub.f32 1.0, %v912
        %v914 = vmul.f32 %v911, %v913
        %v915 = vadd.f32 %v911, %v914
        %vm916 = vweird.f32 %v821
        %vm917 = vweird.f32 %v911
        %vm918 = vmor %vm916, %vm917
        %v919 = vsel %vm918, %v911, %v915
        %v920 = vand.u32 2147483647, %v821
        %vm921 = vcmp.eq.f32.partialorder %v920, 8.507059e+37
        %v922 = vand.u32 %v821, 2147483648
        %v923 = vor.u32 1.1754944e-38, %v922
        %v924 = vsel %vm921, %v923, %v919
        %v925 = vmul.f32 1.0, %v924
        %v926 = vrcp.pop %v822
        %v927 = vmul.f32 %v822, %v926
        %v928 = vsub.f32 1.0, %v927
        %v929 = vmul.f32 %v926, %v928
        %v930 = vadd.f32 %v926, %v929
        %vm931 = vweird.f32 %v822
        %vm932 = vweird.f32 %v926
        %vm933 = vmor %vm931, %vm932
        %v934 = vsel %vm933, %v926, %v930
        %v935 = vand.u32 2147483647, %v822
        %vm936 = vcmp.eq.f32.partialorder %v935, 8.507059e+37
        %v937 = vand.u32 %v822, 2147483648
        %v938 = vor.u32 1.1754944e-38, %v937
        %v939 = vsel %vm936, %v938, %v934
        %v940 = vmul.f32 1.0, %v939
        %v941 = vrcp.pop %v823
        %v942 = vmul.f32 %v823, %v941
        %v943 = vsub.f32 1.0, %v942
        %v944 = vmul.f32 %v941, %v943
        %v945 = vadd.f32 %v941, %v944
        %vm946 = vweird.f32 %v823
        %vm947 = vweird.f32 %v941
        %vm948 = vmor %vm946, %vm947
        %v949 = vsel %vm948, %v941, %v945
        %v950 = vand.u32 2147483647, %v823
        %vm951 = vcmp.eq.f32.partialorder %v950, 8.507059e+37
        %v952 = vand.u32 %v823, 2147483648
        %v953 = vor.u32 1.1754944e-38, %v952
        %v954 = vsel %vm951, %v953, %v949
        %v955 = vmul.f32 1.0, %v954
        %v956 = vrcp.pop %v824
        %v957 = vmul.f32 %v824, %v956
        %v958 = vsub.f32 1.0, %v957
        %v959 = vmul.f32 %v956, %v958
        %v960 = vadd.f32 %v956, %v959
        %vm961 = vweird.f32 %v824
        %vm962 = vweird.f32 %v956
        %vm963 = vmor %vm961, %vm962
        %v964 = vsel %vm963, %v956, %v960
        %v965 = vand.u32 2147483647, %v824
        %vm966 = vcmp.eq.f32.partialorder %v965, 8.507059e+37
        %v967 = vand.u32 %v824, 2147483648
        %v968 = vor.u32 1.1754944e-38, %v967
        %v969 = vsel %vm966, %v968, %v964
        %v970 = vmul.f32 1.0, %v969
        %v971 = vrcp.pop %v825
        %v972 = vmul.f32 %v825, %v971
        %v973 = vsub.f32 1.0, %v972
        %v974 = vmul.f32 %v971, %v973
        %v975 = vadd.f32 %v971, %v974
        %vm976 = vweird.f32 %v825
        %vm977 = vweird.f32 %v971
        %vm978 = vmor %vm976, %vm977
        %v979 = vsel %vm978, %v971, %v975
        %v980 = vand.u32 2147483647, %v825
        %vm981 = vcmp.eq.f32.partialorder %v980, 8.507059e+37
        %v982 = vand.u32 %v825, 2147483648
        %v983 = vor.u32 1.1754944e-38, %v982
        %v984 = vsel %vm981, %v983, %v979
        %v985 = vmul.f32 1.0, %v984
        %v986 = vrcp.pop %v826
        %v987 = vmul.f32 %v826, %v986
        %v988 = vsub.f32 1.0, %v987
        %v989 = vmul.f32 %v986, %v988
        %v990 = vadd.f32 %v986, %v989
        %vm991 = vweird.f32 %v826
        %vm992 = vweird.f32 %v986
        %vm993 = vmor %vm991, %vm992
        %v994 = vsel %vm993, %v986, %v990
        %v995 = vand.u32 2147483647, %v826
        %vm996 = vcmp.eq.f32.partialorder %v995, 8.507059e+37
        %v997 = vand.u32 %v826, 2147483648
        %v998 = vor.u32 1.1754944e-38, %v997
        %v999 = vsel %vm996, %v998, %v994
        %v1000 = vmul.f32 1.0, %v999
        %v1001 = vrcp.pop %v827
        %v1002 = vmul.f32 %v827, %v1001
        %v1003 = vsub.f32 1.0, %v1002
        %v1004 = vmul.f32 %v1001, %v1003
        %v1005 = vadd.f32 %v1001, %v1004
        %vm1006 = vweird.f32 %v827
        %vm1007 = vweird.f32 %v1001
        %vm1008 = vmor %vm1006, %vm1007
        %v1009 = vsel %vm1008, %v1001, %v1005
        %v1010 = vand.u32 2147483647, %v827
        %vm1011 = vcmp.eq.f32.partialorder %v1010, 8.507059e+37
        %v1012 = vand.u32 %v827, 2147483648
        %v1013 = vor.u32 1.1754944e-38, %v1012
        %v1014 = vsel %vm1011, %v1013, %v1009
        %v1015 = vmul.f32 1.0, %v1014
        %v1016 = vrcp.pop %v828
        %v1017 = vmul.f32 %v828, %v1016
        %v1018 = vsub.f32 1.0, %v1017
        %v1019 = vmul.f32 %v1016, %v1018
        %v1020 = vadd.f32 %v1016, %v1019
        %vm1021 = vweird.f32 %v828
        %vm1022 = vweird.f32 %v1016
        %vm1023 = vmor %vm1021, %vm1022
        %v1024 = vsel %vm1023, %v1016, %v1020
        %v1025 = vand.u32 2147483647, %v828
        %vm1026 = vcmp.eq.f32.partialorder %v1025, 8.507059e+37
        %v1027 = vand.u32 %v828, 2147483648
        %v1028 = vor.u32 1.1754944e-38, %v1027
        %v1029 = vsel %vm1026, %v1028, %v1024
        %v1030 = vmul.f32 1.0, %v1029
        %v1031 = vrcp.pop %v829
        %v1032 = vmul.f32 %v829, %v1031
        %v1033 = vsub.f32 1.0, %v1032
        %v1034 = vmul.f32 %v1031, %v1033
        %v1035 = vadd.f32 %v1031, %v1034
        %vm1036 = vweird.f32 %v829
        %vm1037 = vweird.f32 %v1031
        %vm1038 = vmor %vm1036, %vm1037
        %v1039 = vsel %vm1038, %v1031, %v1035
        %v1040 = vand.u32 2147483647, %v829
        %vm1041 = vcmp.eq.f32.partialorder %v1040, 8.507059e+37
        %v1042 = vand.u32 %v829, 2147483648
        %v1043 = vor.u32 1.1754944e-38, %v1042
        %v1044 = vsel %vm1041, %v1043, %v1039
        %v1045 = vmul.f32 1.0, %v1044
        %v1046 = vrcp.pop %v830
        %v1047 = vmul.f32 %v830, %v1046
        %v1048 = vsub.f32 1.0, %v1047
        %v1049 = vmul.f32 %v1046, %v1048
        %v1050 = vadd.f32 %v1046, %v1049
        %vm1051 = vweird.f32 %v830
        %vm1052 = vweird.f32 %v1046
        %vm1053 = vmor %vm1051, %vm1052
        %v1054 = vsel %vm1053, %v1046, %v1050
        %v1055 = vand.u32 2147483647, %v830
        %vm1056 = vcmp.eq.f32.partialorder %v1055, 8.507059e+37
        %v1057 = vand.u32 %v830, 2147483648
        %v1058 = vor.u32 1.1754944e-38, %v1057
        %v1059 = vsel %vm1056, %v1058, %v1054
        %v1060 = vmul.f32 1.0, %v1059
        %v1061 = vrcp.pop %v831
        %v1062 = vmul.f32 %v831, %v1061
        %v1063 = vsub.f32 1.0, %v1062
        %v1064 = vmul.f32 %v1061, %v1063
        %v1065 = vadd.f32 %v1061, %v1064
        %vm1066 = vweird.f32 %v831
        %vm1067 = vweird.f32 %v1061
        %vm1068 = vmor %vm1066, %vm1067
        %v1069 = vsel %vm1068, %v1061, %v1065
        %v1070 = vand.u32 2147483647, %v831
        %vm1071 = vcmp.eq.f32.partialorder %v1070, 8.507059e+37
        %v1072 = vand.u32 %v831, 2147483648
        %v1073 = vor.u32 1.1754944e-38, %v1072
        %v1074 = vsel %vm1071, %v1073, %v1069
        %v1075 = vmul.f32 1.0, %v1074
        %v1076 = vrcp.pop %v832
        %v1077 = vmul.f32 %v832, %v1076
        %v1078 = vsub.f32 1.0, %v1077
        %v1079 = vmul.f32 %v1076, %v1078
        %v1080 = vadd.f32 %v1076, %v1079
        %vm1081 = vweird.f32 %v832
        %vm1082 = vweird.f32 %v1076
        %vm1083 = vmor %vm1081, %vm1082
        %v1084 = vsel %vm1083, %v1076, %v1080
        %v1085 = vand.u32 2147483647, %v832
        %vm1086 = vcmp.eq.f32.partialorder %v1085, 8.507059e+37
        %v1087 = vand.u32 %v832, 2147483648
        %v1088 = vor.u32 1.1754944e-38, %v1087
        %v1089 = vsel %vm1086, %v1088, %v1084
        %v1090 = vmul.f32 1.0, %v1089
        %v1091 = vrcp.pop %v833
        %v1092 = vmul.f32 %v833, %v1091
        %v1093 = vsub.f32 1.0, %v1092
        %v1094 = vmul.f32 %v1091, %v1093
        %v1095 = vadd.f32 %v1091, %v1094
        %vm1096 = vweird.f32 %v833
        %vm1097 = vweird.f32 %v1091
        %vm1098 = vmor %vm1096, %vm1097
        %v1099 = vsel %vm1098, %v1091, %v1095
        %v1100 = vand.u32 2147483647, %v833
        %vm1101 = vcmp.eq.f32.partialorder %v1100, 8.507059e+37
        %v1102 = vand.u32 %v833, 2147483648
        %v1103 = vor.u32 1.1754944e-38, %v1102
        %v1104 = vsel %vm1101, %v1103, %v1099
        %v1105 = vmul.f32 1.0, %v1104
        %v1106 = vrcp.pop %v834
        %v1107 = vmul.f32 %v834, %v1106
        %v1108 = vsub.f32 1.0, %v1107
        %v1109 = vmul.f32 %v1106, %v1108
        %v1110 = vadd.f32 %v1106, %v1109
        %vm1111 = vweird.f32 %v834
        %vm1112 = vweird.f32 %v1106
        %vm1113 = vmor %vm1111, %vm1112
        %v1114 = vsel %vm1113, %v1106, %v1110
        %v1115 = vand.u32 2147483647, %v834
        %vm1116 = vcmp.eq.f32.partialorder %v1115, 8.507059e+37
        %v1117 = vand.u32 %v834, 2147483648
        %v1118 = vor.u32 1.1754944e-38, %v1117
        %v1119 = vsel %vm1116, %v1118, %v1114
        %v1120 = vmul.f32 1.0, %v1119
        %v1121 = vrcp.pop %v835
        %v1122 = vmul.f32 %v835, %v1121
        %v1123 = vsub.f32 1.0, %v1122
        %v1124 = vmul.f32 %v1121, %v1123
        %v1125 = vadd.f32 %v1121, %v1124
        %vm1126 = vweird.f32 %v835
        %vm1127 = vweird.f32 %v1121
        %vm1128 = vmor %vm1126, %vm1127
        %v1129 = vsel %vm1128, %v1121, %v1125
        %v1130 = vand.u32 2147483647, %v835
        %vm1131 = vcmp.eq.f32.partialorder %v1130, 8.507059e+37
        %v1132 = vand.u32 %v835, 2147483648
        %v1133 = vor.u32 1.1754944e-38, %v1132
        %v1134 = vsel %vm1131, %v1133, %v1129
        %v1135 = vmul.f32 1.0, %v1134
        %v1136 = vmul.f32 %v736, %v850
        %v1137 = vmul.f32 %v737, %v865
        %v1138 = vmul.f32 %v738, %v880
        %v1139 = vmul.f32 %v739, %v895
        %v1140 = vmul.f32 %v740, %v910
        %v1141 = vmul.f32 %v741, %v925
        %v1142 = vmul.f32 %v742, %v940
        %v1143 = vmul.f32 %v743, %v955
        %v1144 = vmul.f32 %v744, %v970
        %v1145 = vmul.f32 %v745, %v985
        %v1146 = vmul.f32 %v746, %v1000
        %v1147 = vmul.f32 %v747, %v1015
        %v1148 = vmul.f32 %v748, %v1030
        %v1149 = vmul.f32 %v749, %v1045
        %v1150 = vmul.f32 %v750, %v1060
        %v1151 = vmul.f32 %v751, %v1075
        %v1152 = vmul.f32 %v752, %v1090
        %v1153 = vmul.f32 %v753, %v1105
        %v1154 = vmul.f32 %v754, %v1120
        %v1155 = vmul.f32 %v755, %v1135
        %v1156 = vpack.c.bf16 %v1136, %v1136
        %v1157 = vpack.c.bf16 %v1137, %v1137
        %v1158 = vpack.c.bf16 %v1138, %v1138
        %v1159 = vpack.c.bf16 %v1139, %v1139
        %v1160 = vpack.c.bf16 %v1140, %v1140
        %v1161 = vpack.c.bf16 %v1141, %v1141
        %v1162 = vpack.c.bf16 %v1142, %v1142
        %v1163 = vpack.c.bf16 %v1143, %v1143
        %v1164 = vpack.c.bf16 %v1144, %v1144
        %v1165 = vpack.c.bf16 %v1145, %v1145
        %v1166 = vpack.c.bf16 %v1146, %v1146
        %v1167 = vpack.c.bf16 %v1147, %v1147
        %v1168 = vpack.c.bf16 %v1148, %v1148
        %v1169 = vpack.c.bf16 %v1149, %v1149
        %v1170 = vpack.c.bf16 %v1150, %v1150
        %v1171 = vpack.c.bf16 %v1151, %v1151
        %v1172 = vpack.c.bf16 %v1152, %v1152
        %v1173 = vpack.c.bf16 %v1153, %v1153
        %v1174 = vpack.c.bf16 %v1154, %v1154
        %v1175 = vpack.c.bf16 %v1155, %v1155
        %1176 = vst [vmem:[%s230] sm:$0xf] %v1156
        %1177 = vst [vmem:[%s230 + $0x4] sm:$0xf] %v1157
        %1178 = vst [vmem:[%s230 + $0x8] sm:$0xf] %v1158
        %1179 = vst [vmem:[%s230 + $0xc] sm:$0xf] %v1159
        %1180 = vst [vmem:[%s230 + $0x10] sm:$0xf] %v1160
        %1181 = vst [vmem:[%s230 + $0x14] sm:$0xf] %v1161
        %1182 = vst [vmem:[%s230 + $0x18] sm:$0xf] %v1162
        %1183 = vst [vmem:[%s230 + $0x1c] sm:$0xf] %v1163
        %1184 = vst [vmem:[%s230 + $0x20] sm:$0xf] %v1164
        %1185 = vst [vmem:[%s230 + $0x24] sm:$0xf] %v1165
        %1186 = vst [vmem:[%s230 + $0x28] sm:$0xf] %v1166
        %1187 = vst [vmem:[%s230 + $0x2c] sm:$0xf] %v1167
        %1188 = vst [vmem:[%s230 + $0x30] sm:$0xf] %v1168
        %1189 = vst [vmem:[%s230 + $0x34] sm:$0xf] %v1169
        %1190 = vst [vmem:[%s230 + $0x38] sm:$0xf] %v1170
        %1191 = vst [vmem:[%s230 + $0x3c] sm:$0xf] %v1171
        %1192 = vst [vmem:[%s230 + $0x40] sm:$0xf] %v1172
        %1193 = vst [vmem:[%s230 + $0x44] sm:$0xf] %v1173
        %1194 = vst [vmem:[%s230 + $0x48] sm:$0xf] %v1174
        %1195 = vst [vmem:[%s230 + $0x4c] sm:$0xf] %v1175
        %s1196 = sand.u32 %s97, 1
        %s1197 = scalar_lea.sflag [#allocation4], %s1196
        %s1198 = sand.u32 %s97, 1
        %s1199 = smul.addr %s1198, 80
        %s1200 = scalar_lea.vmem [#allocation8], %s1199
        // Predicated region
        $region45: #{tpu_custom_call.1} parent=31 // pred_check
          %p1201 = pneg %p107
        $region46: #{tpu_custom_call.1} parent=31 // pred_check_branch
          %1203 = sbr.rel (%p1201) target = $region48
        $region47: #{tpu_custom_call.1} parent=31 // pred_region
          %s1204 = smul.u32 20, %s21
          %s1205 = ssub.s32 38, %s1204
          %p1206 = scmp.lt.s32.totalorder %s1205, 20
          %s1207 = scalar_select %p1206, %s1205, 20
          %s1208 = smul.u32 4, %s1207
          %s1209 = ssub.s32 80, %s1208
          %s1210 = sshll.u32 %s1209, 4
          %1211 = vsyncadd %s1197, %s1210
          %p1212 = scmp.ne.s32.totalorder 0, %s1208
          %s1213 = smul.addr %s1204, 4
          %s1214 = scalar_lea.hbm %s3, %s1213
          %s1215 = smul.u32 4, %s1207
          %s1216 = sshll.u32 %s1200, 4
          %s1217 = int_to_ptr.vmem [resolvable:$true] %s1216
          %s1218 = sshll.u32 %s1214, 4
          %s1219 = int_to_ptr.hbm [resolvable:$true] %s1218
          %s1220 = sshll.u32 %s1215, 4
          %1224 = dma.vmem_to_hbm [thread:$0]  (%p1212), %s1217, %s1220, %s1219, %s1197, 64, 64, 4
        $region48: #{tpu_custom_call.1} parent=31 // pred_fallthru
          _
      $region32: #{tpu_custom_call.1} parent=5 // pred_fallthru
        _
      %p1225 = scmp.le.s32.totalorder 2, %s16
      // Predicated region
      $region49: #{tpu_custom_call.1} parent=5 // pred_check
        %p1226 = pneg %p1225
      $region50: #{tpu_custom_call.1} parent=5 // pred_check_branch
        %1228 = sbr.rel (%p1226) target = $region52
      $region51: #{tpu_custom_call.1} parent=5 // pred_region
        %s1229 = ssub.s32 %s16, 2
        // Predicated region
        $region53: #{tpu_custom_call.1} parent=51 // pred_check
          %p1230 = pneg %p113
        $region54: #{tpu_custom_call.1} parent=51 // pred_check_branch
          %1232 = sbr.rel (%p1230) target = $region56
        $region55: #{tpu_custom_call.1} parent=51 // pred_region
          %s1233 = sand.u32 %s98, 1
          %s1234 = scalar_lea.sflag [#allocation4], %s1233
          %s1235 = sand.u32 %s98, 1
          %s1236 = smul.addr %s1235, 80
          %s1237 = scalar_lea.vmem [#allocation8], %s1236
          %1239 = dma.done %s1234, 1280
        $region56: #{tpu_custom_call.1} parent=51 // pred_fallthru
          _
      $region52: #{tpu_custom_call.1} parent=5 // pred_fallthru
        _
    $region6: #{tpu_custom_call.1} parent=1 // loop_footer
      %s20 = sadd.s32 1, %s16
    $region7: #{tpu_custom_call.1} parent=1 // loop_footer_branch
      %15 = sbr.rel target = $region3
    $region8: #{tpu_custom_call.1} parent=1 // loop_exit
      _
    %1240 = vsyncpa [#allocation3], 1
    %s1241 = scalar_lea.sflag [#allocation3], 1
    %1242 = vsyncpa %s1241, 1
    %1243 = vsyncpa [#allocation6], 1
    %1244 = vsyncpa [#allocation4], 1
    %s1245 = scalar_lea.sflag [#allocation4], 1
    %1246 = vsyncpa %s1245, 1

</llo_original>
